<compile_context>
chip_gen: v6e
topology: v6e:2x2x1
jax: 0.10.0
libtpu: 0.0.40
codegen_flags: <defaults>
</compile_context>

<pallas_src>
import functools

import jax
import jax.numpy as jnp
from jax import lax
from jax.experimental import pallas as pl
from jax.experimental.pallas import tpu as pltpu


def _round_up(a: int, b: int) -> int:
    return (a + b - 1) // b * b


def _le_knn_kernel(colsq_ref, xt_ref, xw_ref, xtile_ref, out_ref, *,
                   k: int, n_valid: int):
    """One (TM, N) row-slab: kNN selection mask + single neighbor-sum matmul."""
    x_tile = xtile_ref[...]                       # (TM, D)   rows owned by this tile
    xT     = xt_ref[...]                          # (D,  Np)  all samples, transposed
    xw     = xw_ref[...]                          # (Np, Op)  x @ A (lane-padded)
    colsq  = colsq_ref[...]                       # (1,  Np)  ||x_j||^2

    tm  = x_tile.shape[0]
    np_ = xT.shape[1]

    # d[i, j] = ||x_j||^2 - 2 <x_i, x_j>   (same per-row argmin ordering as
    # cdist; the row-constant ||x_i||^2 term is dropped -> no transpose needed).
    gram = jnp.dot(x_tile, xT, preferred_element_type=jnp.float32)   # (TM, Np)
    d = colsq - 2.0 * gram

    col = lax.broadcasted_iota(jnp.int32, (tm, np_), 1)
    row_g = lax.broadcasted_iota(jnp.int32, (tm, np_), 0) + pl.program_id(0) * tm
    inf = jnp.float32(jnp.inf)
    # Mask the diagonal (self-distance) and any padded columns.
    d = jnp.where((col == row_g) | (col >= n_valid), inf, d)

    def body(_, carry):
        dc, adj = carry
        m = jnp.min(dc, axis=1, keepdims=True)                        # (TM, 1)
        cand = dc == m
        # lowest-index minimizer per row (torch-style tie-break) -> one-hot row
        first = jnp.min(jnp.where(cand, col, np_), axis=1, keepdims=True)
        chosen = col == first                                         # (TM, Np)
        adj = adj + chosen.astype(jnp.float32)                        # 0/1 mask
        dc = jnp.where(chosen, inf, dc)
        return dc, adj

    _, adj = lax.fori_loop(
        0, k, body, (d, jnp.zeros((tm, np_), jnp.float32)), unroll=True)

    # Single skinny MXU matmul per tile: sum of selected projected rows.
    out_ref[...] = jnp.dot(adj, xw, preferred_element_type=jnp.float32)


def le_layer_forward(x: jax.Array, A: jax.Array, n_neighbors: int = 5,
                     *, block_rows: int = 128) -> jax.Array:
    """Pallas implementation of LELayer.forward(x) (no precomputed neighbors)."""
    N, D = x.shape
    O = A.shape[1]
    k = min(n_neighbors, N)

    x = x.astype(jnp.float32)
    A = A.astype(jnp.float32)

    if k >= N:
        # torch.topk with k == N selects every column (incl. the +inf diagonal):
        # every row receives the sum over all projected samples.
        xW = jnp.dot(x, A, preferred_element_type=jnp.float32)
        return jnp.broadcast_to(jnp.sum(xW, axis=0, keepdims=True), (N, O))

    # Tiling / padding choices.
    tm = min(_round_up(block_rows, 8), _round_up(N, 8))
    Np = _round_up(N, tm)                 # rows padded to a multiple of TM
    Op = _round_up(O, 128)                # lane-dense output / xW

    xp = jnp.pad(x, ((0, Np - N), (0, 0)))                 # (Np, D)
    Ap = jnp.pad(A, ((0, 0), (0, Op - O)))                 # (D, Op)

    # Hoisted out of the per-tile kernel.
    xW = jnp.dot(xp, Ap, preferred_element_type=jnp.float32)        # (Np, Op)
    xT = xp.T                                                        # (D, Np)
    colsq = jnp.sum(xp * xp, axis=1)[None, :]                        # (1, Np)

    grid = (Np // tm,)

    # VMEM budget: resident inputs (x2 buffers) + tiled input/output (x2) +
    # loop-carried (TM, Np) distance slab + (TM, Np) adjacency + headroom.
    resident = 4 * (Np + D * Np + Np * Op)
    per_tile = 4 * (tm * D + tm * Op)
    working  = 4 * (3 * tm * Np + tm * Op)
    vmem_limit = int(min(max(2 * resident + 2 * per_tile + working + (2 << 20),
                             32 * 1024 * 1024),
                         64 * 1024 * 1024))

    flops = int(2 * Np * D * Np          # per-tile gram, summed over grid
                + 2 * Np * Np * Op)      # one adjacency @ xW matmul per tile
    bytes_accessed = int(4 * (grid[0] * (Np + D * Np + Np * Op)
                              + Np * D + Np * Op))

    out = pl.pallas_call(
        functools.partial(_le_knn_kernel, k=k, n_valid=N),
        out_shape=jax.ShapeDtypeStruct((Np, Op), jnp.float32),
        grid=grid,
        in_specs=[
            pl.BlockSpec((1, Np),  lambda i: (0, 0)),   # column norms (resident)
            pl.BlockSpec((D, Np),  lambda i: (0, 0)),   # x^T          (resident)
            pl.BlockSpec((Np, Op), lambda i: (0, 0)),   # x @ A        (resident)
            pl.BlockSpec((tm, D),  lambda i: (i, 0)),   # this tile's rows
        ],
        out_specs=pl.BlockSpec((tm, Op), lambda i: (i, 0)),
        compiler_params=pltpu.CompilerParams(
            dimension_semantics=("parallel",),
            vmem_limit_bytes=vmem_limit,
        ),
        cost_estimate=pl.CostEstimate(
            flops=flops, transcendentals=0, bytes_accessed=bytes_accessed),
    )(colsq, xT, xW, xp)

    return out[:N, :O]


def _reference_forward(x, A, n_neighbors):
    """Pure-JAX reference matching the PyTorch module."""
    N = x.shape[0]
    k = min(n_neighbors, N)
    d = jnp.sqrt(jnp.maximum(
        jnp.sum((x[:, None, :] - x[None, :, :]) ** 2, axis=-1), 0.0))
    d = d.at[jnp.arange(N), jnp.arange(N)].set(jnp.inf)
    _, idx = lax.top_k(-d, k)                      # k smallest distances
    xW = x @ A
    return jnp.sum(xW[idx], axis=1)                # (N, O)


if __name__ == "__main__":
    key = jax.random.PRNGKey(0)

    # Case 1: shapes consistent with the module defaults.
    N, INPUT_DIM, OUTPUT_DIM, N_NEIGHBORS = 16, 8, 16, 5
    kx, ka, key = jax.random.split(key, 3)
    x = jax.random.normal(kx, (N, INPUT_DIM), dtype=jnp.float32)
    A = jax.random.normal(ka, (INPUT_DIM, OUTPUT_DIM), dtype=jnp.float32)

    out = jax.block_until_ready(le_layer_forward(x, A, N_NEIGHBORS))
    ref = _reference_forward(x, A, N_NEIGHBORS)
    assert out.shape == (N, OUTPUT_DIM)
    assert jnp.allclose(out, ref, atol=1e-4, rtol=1e-4), (
        f"max abs err = {jnp.max(jnp.abs(out - ref))}")

    # Case 2: exercises row/lane padding and a multi-tile ("parallel") grid.
    N2, D2, O2, K2 = 20, 8, 10, 3
    kx2, ka2, key = jax.random.split(key, 3)
    x2 = jax.random.normal(kx2, (N2, D2), dtype=jnp.float32)
    A2 = jax.random.normal(ka2, (D2, O2), dtype=jnp.float32)

    out2 = jax.block_until_ready(le_layer_forward(x2, A2, K2, block_rows=8))
    ref2 = _reference_forward(x2, A2, K2)
    assert out2.shape == (N2, O2)
    assert jnp.allclose(out2, ref2, atol=1e-4, rtol=1e-4), (
        f"max abs err = {jnp.max(jnp.abs(out2 - ref2))}")

    # Case 3: k >= N fallback path (topk selects every column).
    out3 = jax.block_until_ready(le_layer_forward(x2[:4], A2, 8))
    ref3 = _reference_forward(x2[:4], A2, 8)
    assert jnp.allclose(out3, ref3, atol=1e-4, rtol=1e-4), (
        f"max abs err = {jnp.max(jnp.abs(out3 - ref3))}")

    print("KERNEL_OK")
</pallas_src>

<mosaic_0001>
module attributes {stable_mosaic.version = 11 : i64} {
  func.func @_le_knn_kernel(%arg0: i32, %arg1: memref<1x16xf32, #tpu.memory_space<vmem>>, %arg2: memref<8x16xf32, #tpu.memory_space<vmem>>, %arg3: memref<16x128xf32, #tpu.memory_space<vmem>>, %arg4: memref<16x8xf32, #tpu.memory_space<vmem>>, %arg5: memref<16x128xf32, #tpu.memory_space<vmem>>) attributes {dimension_semantics = [#tpu.dimension_semantics<parallel>], iteration_bounds = array<i64: 1>, scalar_prefetch = 0 : i64, scratch_operands = 0 : i64, tpu.core_type = #tpu.core_type<tc>, window_params = [{pipeline_mode = #tpu.pipeline_mode<synchronous>, transform_indices = @transform_0, window_bounds = array<i64: 1, 16>}, {pipeline_mode = #tpu.pipeline_mode<synchronous>, transform_indices = @transform_1, window_bounds = array<i64: 8, 16>}, {pipeline_mode = #tpu.pipeline_mode<synchronous>, transform_indices = @transform_2, window_bounds = array<i64: 16, 128>}, {transform_indices = @transform_3, window_bounds = array<i64: 16, 8>}, {transform_indices = @transform_4, window_bounds = array<i64: 16, 128>}]} {
    %c0 = arith.constant 0 : index
    %c0_0 = arith.constant 0 : index
    %0 = vector.load %arg4[%c0, %c0_0] : memref<16x8xf32, #tpu.memory_space<vmem>>, vector<16x8xf32>
    %c0_1 = arith.constant 0 : index
    %c0_2 = arith.constant 0 : index
    %1 = vector.load %arg2[%c0_1, %c0_2] : memref<8x16xf32, #tpu.memory_space<vmem>>, vector<8x16xf32>
    %c0_3 = arith.constant 0 : index
    %c0_4 = arith.constant 0 : index
    %2 = vector.load %arg3[%c0_3, %c0_4] : memref<16x128xf32, #tpu.memory_space<vmem>>, vector<16x128xf32>
    %c0_5 = arith.constant 0 : index
    %c0_6 = arith.constant 0 : index
    %3 = vector.load %arg1[%c0_5, %c0_6] : memref<1x16xf32, #tpu.memory_space<vmem>>, vector<1x16xf32>
    %cst = arith.constant dense<0.000000e+00> : vector<16x16xf32>
    %4 = tpu.matmul %0, %1, %cst {dimension_numbers = #tpu.dot_dimension_numbers<[1], [0], [0], [1], [0, 0, 1, 1], [], []>} : vector<16x8xf32>, vector<8x16xf32>, vector<16x16xf32> -> vector<16x16xf32>
    %cst_7 = arith.constant 2.000000e+00 : f32
    %5 = vector.broadcast %cst_7 : f32 to vector<16x16xf32>
    %6 = arith.mulf %5, %4 : vector<16x16xf32>
    %7 = vector.broadcast %3 : vector<1x16xf32> to vector<16x16xf32>
    %8 = arith.subf %7, %6 : vector<16x16xf32>
    %9 = tpu.iota {dimensions = array<i32: 1>} : vector<16x16xi32>
    %10 = tpu.iota {dimensions = array<i32: 0>} : vector<16x16xi32>
    %c16_i32 = arith.constant 16 : i32
    %11 = arith.muli %arg0, %c16_i32 : i32
    %12 = vector.broadcast %11 : i32 to vector<16x16xi32>
    %13 = arith.addi %10, %12 : vector<16x16xi32>
    %14 = arith.cmpi eq, %9, %13 : vector<16x16xi32>
    %c16_i32_8 = arith.constant 16 : i32
    %15 = vector.broadcast %c16_i32_8 : i32 to vector<16x16xi32>
    %16 = arith.cmpi sge, %9, %15 : vector<16x16xi32>
    %17 = arith.ori %14, %16 : vector<16x16xi1>
    %cst_9 = arith.constant 0x7F800000 : f32
    %18 = vector.broadcast %cst_9 : f32 to vector<16x16xf32>
    %19 = arith.select %17, %18, %8 : vector<16x16xi1>, vector<16x16xf32>
    %cst_10 = arith.constant 0.000000e+00 : f32
    %20 = vector.broadcast %cst_10 : f32 to vector<16x16xf32>
    %cst_11 = arith.constant 0x7F800000 : f32
    %c0_i32 = arith.constant 0 : i32
    %cst_12 = arith.constant dense<0x7F800000> : vector<16xf32>
    %21 = vector.multi_reduction <minimumf>, %19, %cst_12 [1] : vector<16x16xf32> to vector<16xf32>
    %22 = vector.shape_cast %21 : vector<16xf32> to vector<16x1xf32>
    %23 = vector.broadcast %22 : vector<16x1xf32> to vector<16x16xf32>
    %24 = arith.cmpf oeq, %19, %23 : vector<16x16xf32>
    %c16_i32_13 = arith.constant 16 : i32
    %25 = vector.broadcast %c16_i32_13 : i32 to vector<16x16xi32>
    %26 = arith.select %24, %9, %25 : vector<16x16xi1>, vector<16x16xi32>
    %cst_14 = arith.constant dense<2147483647> : vector<16xi32>
    %27 = vector.multi_reduction <minsi>, %26, %cst_14 [1] : vector<16x16xi32> to vector<16xi32>
    %28 = vector.shape_cast %27 : vector<16xi32> to vector<16x1xi32>
    %29 = vector.broadcast %28 : vector<16x1xi32> to vector<16x16xi32>
    %30 = arith.cmpi eq, %9, %29 : vector<16x16xi32>
    %31 = arith.extui %30 : vector<16x16xi1> to vector<16x16xi32>
    %32 = arith.sitofp %31 : vector<16x16xi32> to vector<16x16xf32>
    %33 = arith.addf %20, %32 : vector<16x16xf32>
    %34 = vector.broadcast %cst_11 : f32 to vector<16x16xf32>
    %35 = arith.select %30, %34, %19 : vector<16x16xi1>, vector<16x16xf32>
    %c1_i32 = arith.constant 1 : i32
    %cst_15 = arith.constant dense<0x7F800000> : vector<16xf32>
    %36 = vector.multi_reduction <minimumf>, %35, %cst_15 [1] : vector<16x16xf32> to vector<16xf32>
    %37 = vector.shape_cast %36 : vector<16xf32> to vector<16x1xf32>
    %38 = vector.broadcast %37 : vector<16x1xf32> to vector<16x16xf32>
    %39 = arith.cmpf oeq, %35, %38 : vector<16x16xf32>
    %c16_i32_16 = arith.constant 16 : i32
    %40 = vector.broadcast %c16_i32_16 : i32 to vector<16x16xi32>
    %41 = arith.select %39, %9, %40 : vector<16x16xi1>, vector<16x16xi32>
    %cst_17 = arith.constant dense<2147483647> : vector<16xi32>
    %42 = vector.multi_reduction <minsi>, %41, %cst_17 [1] : vector<16x16xi32> to vector<16xi32>
    %43 = vector.shape_cast %42 : vector<16xi32> to vector<16x1xi32>
    %44 = vector.broadcast %43 : vector<16x1xi32> to vector<16x16xi32>
    %45 = arith.cmpi eq, %9, %44 : vector<16x16xi32>
    %46 = arith.extui %45 : vector<16x16xi1> to vector<16x16xi32>
    %47 = arith.sitofp %46 : vector<16x16xi32> to vector<16x16xf32>
    %48 = arith.addf %33, %47 : vector<16x16xf32>
    %49 = vector.broadcast %cst_11 : f32 to vector<16x16xf32>
    %50 = arith.select %45, %49, %35 : vector<16x16xi1>, vector<16x16xf32>
    %c2_i32 = arith.constant 2 : i32
    %cst_18 = arith.constant dense<0x7F800000> : vector<16xf32>
    %51 = vector.multi_reduction <minimumf>, %50, %cst_18 [1] : vector<16x16xf32> to vector<16xf32>
    %52 = vector.shape_cast %51 : vector<16xf32> to vector<16x1xf32>
    %53 = vector.broadcast %52 : vector<16x1xf32> to vector<16x16xf32>
    %54 = arith.cmpf oeq, %50, %53 : vector<16x16xf32>
    %c16_i32_19 = arith.constant 16 : i32
    %55 = vector.broadcast %c16_i32_19 : i32 to vector<16x16xi32>
    %56 = arith.select %54, %9, %55 : vector<16x16xi1>, vector<16x16xi32>
    %cst_20 = arith.constant dense<2147483647> : vector<16xi32>
    %57 = vector.multi_reduction <minsi>, %56, %cst_20 [1] : vector<16x16xi32> to vector<16xi32>
    %58 = vector.shape_cast %57 : vector<16xi32> to vector<16x1xi32>
    %59 = vector.broadcast %58 : vector<16x1xi32> to vector<16x16xi32>
    %60 = arith.cmpi eq, %9, %59 : vector<16x16xi32>
    %61 = arith.extui %60 : vector<16x16xi1> to vector<16x16xi32>
    %62 = arith.sitofp %61 : vector<16x16xi32> to vector<16x16xf32>
    %63 = arith.addf %48, %62 : vector<16x16xf32>
    %64 = vector.broadcast %cst_11 : f32 to vector<16x16xf32>
    %65 = arith.select %60, %64, %50 : vector<16x16xi1>, vector<16x16xf32>
    %c3_i32 = arith.constant 3 : i32
    %cst_21 = arith.constant dense<0x7F800000> : vector<16xf32>
    %66 = vector.multi_reduction <minimumf>, %65, %cst_21 [1] : vector<16x16xf32> to vector<16xf32>
    %67 = vector.shape_cast %66 : vector<16xf32> to vector<16x1xf32>
    %68 = vector.broadcast %67 : vector<16x1xf32> to vector<16x16xf32>
    %69 = arith.cmpf oeq, %65, %68 : vector<16x16xf32>
    %c16_i32_22 = arith.constant 16 : i32
    %70 = vector.broadcast %c16_i32_22 : i32 to vector<16x16xi32>
    %71 = arith.select %69, %9, %70 : vector<16x16xi1>, vector<16x16xi32>
    %cst_23 = arith.constant dense<2147483647> : vector<16xi32>
    %72 = vector.multi_reduction <minsi>, %71, %cst_23 [1] : vector<16x16xi32> to vector<16xi32>
    %73 = vector.shape_cast %72 : vector<16xi32> to vector<16x1xi32>
    %74 = vector.broadcast %73 : vector<16x1xi32> to vector<16x16xi32>
    %75 = arith.cmpi eq, %9, %74 : vector<16x16xi32>
    %76 = arith.extui %75 : vector<16x16xi1> to vector<16x16xi32>
    %77 = arith.sitofp %76 : vector<16x16xi32> to vector<16x16xf32>
    %78 = arith.addf %63, %77 : vector<16x16xf32>
    %79 = vector.broadcast %cst_11 : f32 to vector<16x16xf32>
    %80 = arith.select %75, %79, %65 : vector<16x16xi1>, vector<16x16xf32>
    %c4_i32 = arith.constant 4 : i32
    %cst_24 = arith.constant dense<0x7F800000> : vector<16xf32>
    %81 = vector.multi_reduction <minimumf>, %80, %cst_24 [1] : vector<16x16xf32> to vector<16xf32>
    %82 = vector.shape_cast %81 : vector<16xf32> to vector<16x1xf32>
    %83 = vector.broadcast %82 : vector<16x1xf32> to vector<16x16xf32>
    %84 = arith.cmpf oeq, %80, %83 : vector<16x16xf32>
    %c16_i32_25 = arith.constant 16 : i32
    %85 = vector.broadcast %c16_i32_25 : i32 to vector<16x16xi32>
    %86 = arith.select %84, %9, %85 : vector<16x16xi1>, vector<16x16xi32>
    %cst_26 = arith.constant dense<2147483647> : vector<16xi32>
    %87 = vector.multi_reduction <minsi>, %86, %cst_26 [1] : vector<16x16xi32> to vector<16xi32>
    %88 = vector.shape_cast %87 : vector<16xi32> to vector<16x1xi32>
    %89 = vector.broadcast %88 : vector<16x1xi32> to vector<16x16xi32>
    %90 = arith.cmpi eq, %9, %89 : vector<16x16xi32>
    %91 = arith.extui %90 : vector<16x16xi1> to vector<16x16xi32>
    %92 = arith.sitofp %91 : vector<16x16xi32> to vector<16x16xf32>
    %93 = arith.addf %78, %92 : vector<16x16xf32>
    %94 = vector.broadcast %cst_11 : f32 to vector<16x16xf32>
    %95 = arith.select %90, %94, %80 : vector<16x16xi1>, vector<16x16xf32>
    %cst_27 = arith.constant dense<0.000000e+00> : vector<16x128xf32>
    %96 = tpu.matmul %93, %2, %cst_27 {dimension_numbers = #tpu.dot_dimension_numbers<[1], [0], [0], [1], [0, 0, 1, 1], [], []>} : vector<16x16xf32>, vector<16x128xf32>, vector<16x128xf32> -> vector<16x128xf32>
    %c0_28 = arith.constant 0 : index
    %c0_29 = arith.constant 0 : index
    %97 = vector.load %arg5[%c0_28, %c0_29] : memref<16x128xf32, #tpu.memory_space<vmem>>, vector<16x128xf32>
    tpu.vector_store %arg5[%c0_28, %c0_29], %96 {strides = array<i32>} : memref<16x128xf32, #tpu.memory_space<vmem>>, vector<16x128xf32>,
    return
  }
  func.func @transform_0(%arg0: i32) -> (i32, i32) {
    %c0_i32 = arith.constant 0 : i32
    %c0_i32_0 = arith.constant 0 : i32
    %c0_i32_1 = arith.constant 0 : i32
    return %c0_i32, %c0_i32_0 : i32, i32
  }
  func.func @transform_1(%arg0: i32) -> (i32, i32) {
    %c0_i32 = arith.constant 0 : i32
    %c0_i32_0 = arith.constant 0 : i32
    %c0_i32_1 = arith.constant 0 : i32
    return %c0_i32, %c0_i32_0 : i32, i32
  }
  func.func @transform_2(%arg0: i32) -> (i32, i32) {
    %c0_i32 = arith.constant 0 : i32
    %c0_i32_0 = arith.constant 0 : i32
    %c0_i32_1 = arith.constant 0 : i32
    return %c0_i32, %c0_i32_0 : i32, i32
  }
  func.func @transform_3(%arg0: i32) -> (i32, i32) {
    %c0_i32 = arith.constant 0 : i32
    %c0_i32_0 = arith.constant 0 : i32
    return %arg0, %c0_i32 : i32, i32
  }
  func.func @transform_4(%arg0: i32) -> (i32, i32) {
    %c0_i32 = arith.constant 0 : i32
    %c0_i32_0 = arith.constant 0 : i32
    return %arg0, %c0_i32 : i32, i32
  }
}

</mosaic_0001>

<llo_original>
// kernel: tpu_custom_call.1
$region0: #{tpu_custom_call.1}
  #allocation0 [shape = 'u32[]', space=smem, size = 0x4, offset = 0x4, fixed_abs, tag = 'smem constant byte address 0x4 - core index']
  #allocation1 [shape = 'u32[144,128]{1,0:T(1,128)}', space=vmem, size = 0x12000, scoped, tag = 'internal scratch']
  %s0 = inlined_call_operand.vmem [shape: f32[1,16], index: 0, kind: input, shape index: {}]
  %s1 = inlined_call_operand.vmem [shape: f32[8,16], index: 1, kind: input, shape index: {}]
  %s2 = inlined_call_operand.vmem [shape: f32[16,128], index: 2, kind: input, shape index: {}]
  %s3 = inlined_call_operand.vmem [shape: f32[16,8], index: 3, kind: input, shape index: {}]
  %s4 = inlined_call_operand.hbm [shape: f32[16,128], index: 4, kind: output, shape index: {}]
  %s5 = sld [smem:[#allocation0]]
  $region26: #{tpu_custom_call.1} parent=0
    _
  %s7 = ssub.s32 1, %s5
  %s8 = scalar_select 0, %s7, %s5
  $region1: #{tpu_custom_call.1} parent=0
    #allocation2 [shape = 'u8[8192]{0}', space=vmem, size = 0x2000, scoped, tag = 'output window, operand 0, single buffered']
    #allocation3 [shape = 's32[1]{0}', space=sflag, size = 0x4, scoped, tag = 'scoped memory for tpu_custom_call.1']
    %9 = vsyncpa [#allocation3], 0
    // Predicated region
    $region2: #{tpu_custom_call.1} parent=1 // pred_check
      _
    $region3: #{tpu_custom_call.1} parent=1 // pred_check_branch
      %11 = sbr.rel (0) target = $region5
    $region4: #{tpu_custom_call.1} parent=1 // pred_region
      _
    $region5: #{tpu_custom_call.1} parent=1 // pred_fallthru
      _
    // Predicated region
    $region6: #{tpu_custom_call.1} parent=1 // pred_check
      _
    $region7: #{tpu_custom_call.1} parent=1 // pred_check_branch
      %13 = sbr.rel (0) target = $region9
    $region8: #{tpu_custom_call.1} parent=1 // pred_region
      _
    $region9: #{tpu_custom_call.1} parent=1 // pred_fallthru
      _
    // Predicated region
    $region10: #{tpu_custom_call.1} parent=1 // pred_check
      _
    $region11: #{tpu_custom_call.1} parent=1 // pred_check_branch
      %15 = sbr.rel (0) target = $region13
    $region12: #{tpu_custom_call.1} parent=1 // pred_region
      _
    $region13: #{tpu_custom_call.1} parent=1 // pred_fallthru
      _
    // Predicated region
    $region14: #{tpu_custom_call.1} parent=1 // pred_check
      _
    $region15: #{tpu_custom_call.1} parent=1 // pred_check_branch
      %17 = sbr.rel (0) target = $region17
    $region16: #{tpu_custom_call.1} parent=1 // pred_region
      _
    $region17: #{tpu_custom_call.1} parent=1 // pred_fallthru
      _
    %v18 = vld [vmem:[%s3] sm:$0xff]
    %v19 = vld [vmem:[%s3 + $0x8] sm:$0xff]
    %v20 = vld [vmem:[%s1] sm:$0xff]
    %v21 = vld [vmem:[%s2] sm:$0xff]
    %v22 = vld [vmem:[%s2 + $0x8] sm:$0xff]
    %v23 = vld [vmem:[%s0] sm:$0x1]
    %vm24 = vcmask 64512
    %v26 = vsel %vm24, %v18, 0
    %v29 = vsel %vm24, %v19, 0
    %31 = vmatprep.subr.mxu0 0.0
    %32 = vmatpush1.msra.mxu0 0.0
    %33 = vmatprep.subr.mxu0 0.0
    %34 = vmatpush1.msra.mxu0 0.0
    %35 = vmatprep.subr.mxu0 0.0
    %36 = vmatpush1.msra.mxu0 0.0
    %37 = vmatprep.subr.mxu0 0.0
    %38 = vmatpush1.msra.mxu0 0.0
    %39 = vmatprep.subr.mxu0 0.0
    %40 = vmatpush1.msra.mxu0 0.0
    %41 = vmatprep.subr.mxu0 0.0
    %42 = vmatpush1.msra.mxu0 0.0
    %43 = vmatprep.subr.mxu0 0.0
    %44 = vmatpush1.msra.mxu0 0.0
    %45 = vmatprep.subr.mxu0 0.0
    %46 = vmatpush1.msra.mxu0 0.0
    %47 = vmatprep.subr.mxu0 0.0
    %48 = vmatpush1.msra.mxu0 0.0
    %49 = vmatprep.subr.mxu0 0.0
    %50 = vmatpush1.msra.mxu0 0.0
    %51 = vmatprep.subr.mxu0 0.0
    %52 = vmatpush1.msra.mxu0 0.0
    %53 = vmatprep.subr.mxu0 0.0
    %54 = vmatpush1.msra.mxu0 0.0
    %55 = vmatprep.subr.mxu0 0.0
    %56 = vmatpush1.msra.mxu0 0.0
    %57 = vmatprep.subr.mxu0 0.0
    %58 = vmatpush1.msra.mxu0 0.0
    %59 = vmatprep.subr.mxu0 0.0
    %60 = vmatpush1.msra.mxu0 0.0
    %61 = vmatprep.subr.mxu0 0.0
    %62 = vmatpush1.msra.mxu0 %v20
    %63 = vmatprep.subr.mxu0 0.0
    %64 = vmatpush2.msra.mxu0 0.0
    %65 = vmatprep.subr.mxu0 0.0
    %66 = vmatpush2.msra.mxu0 0.0
    %67 = vmatprep.subr.mxu0 0.0
    %68 = vmatpush2.msra.mxu0 0.0
    %69 = vmatprep.subr.mxu0 0.0
    %70 = vmatpush2.msra.mxu0 0.0
    %71 = vmatprep.subr.mxu0 0.0
    %72 = vmatpush2.msra.mxu0 0.0
    %73 = vmatprep.subr.mxu0 0.0
    %74 = vmatpush2.msra.mxu0 0.0
    %75 = vmatprep.subr.mxu0 0.0
    %76 = vmatpush2.msra.mxu0 0.0
    %77 = vmatprep.subr.mxu0 0.0
    %78 = vmatpush2.msra.mxu0 0.0
    %79 = vmatprep.subr.mxu0 0.0
    %80 = vmatpush2.msra.mxu0 0.0
    %81 = vmatprep.subr.mxu0 0.0
    %82 = vmatpush2.msra.mxu0 0.0
    %83 = vmatprep.subr.mxu0 0.0
    %84 = vmatpush2.msra.mxu0 0.0
    %85 = vmatprep.subr.mxu0 0.0
    %86 = vmatpush2.msra.mxu0 0.0
    %87 = vmatprep.subr.mxu0 0.0
    %88 = vmatpush2.msra.mxu0 0.0
    %89 = vmatprep.subr.mxu0 0.0
    %90 = vmatpush2.msra.mxu0 0.0
    %91 = vmatprep.subr.mxu0 0.0
    %92 = vmatpush2.msra.mxu0 0.0
    %93 = vmatprep.subr.mxu0 0.0
    %94 = vmatpush2.msra.mxu0 0.0
    %95 = vmatprep.mubr.f32.mxu0 0.0
    %96 = vmatmul.mubr.f32.gmra.mxu0 %v26
    %v97 = vpop.f32.mrf.mxu0
    %v98 = vadd.f32 0.0, %v97
    %v99 = vpop.f32.mrf.mxu0
    %100 = vmatprep.mubr.f32.mxu0 0.0
    %101 = vmatmul.mubr.f32.gmra.mxu0 %v29
    %v102 = vpop.f32.mrf.mxu0
    %v103 = vadd.f32 0.0, %v102
    %v104 = vpop.f32.mrf.mxu0
    %105 = vdwg.mxu0
    %v106 = vmul.f32 %v98, 2.0
    %v107 = vmul.f32 %v103, 2.0
    %v109 = vlaneseq
    %v110 = vshrl.u32 %v109, 7
    %v111 = vsub.s32 0, %v110
    %v112 = vrot.slane %v23, %v111
    %v114 = vsub.f32 %v112, %v106
    %v115 = vsub.f32 %v112, %v107
    %v116 = vlaneseq
    %v117 = vand.u32 %v116, 127
    %v118 = vlaneseq
    %v119 = vshrl.u32 %v118, 7
    %v120 = vadd.s32 %v119, 8
    %s121 = smul.u32 0, 16
    %v122 = vstv %s121
    %v123 = vadd.s32 %v119, %v122
    %v124 = vadd.s32 %v120, %v122
    %vm125 = vcmp.eq.s32.totalorder %v117, %v123
    %vm126 = vcmp.eq.s32.totalorder %v117, %v124
    %vm127 = vcmp.ge.s32.totalorder %v117, 16
    %vm128 = vmor %vm125, %vm127
    %vm129 = vmor %vm126, %vm127
    %v130 = vsel %vm128, inf, %v114
    %v131 = vsel %vm129, inf, %v115
    %vm132 = vcmask 130048
    %v133 = vsel %vm132, %v130, inf
    %134 = vmin.xlane.f32.xlu0 %v133
    %v135 = vpop.xlane.xlu0 %134
    %v136 = vsel %vm132, %v131, inf
    %137 = vmin.xlane.f32.xlu0 %v136
    %v138 = vpop.xlane.xlu0 %137
    %vm139 = vcmp.eq.f32.partialorder %v130, %v135
    %vm140 = vcmp.eq.f32.partialorder %v131, %v138
    %v141 = vsel %vm139, %v117, 16
    %v142 = vsel %vm140, %v117, 16
    %v143 = vsel %vm132, %v141, 2147483647
    %v144 = vand.u32 %v143, 65535
    %v145 = vshra.s32 %v143, 16
    %v146 = vcvt.s32.f32 %v144
    %v147 = vcvt.s32.f32 %v145
    %148 = vmin.xlane.f32.xlu0 %v147
    %v149 = vpop.xlane.xlu0 %148
    %vm150 = vcmp.eq.f32.partialorder %v147, %v149
    %v151 = vsel %vm150, %v146, inf
    %152 = vmin.xlane.f32.xlu0 %v151
    %v153 = vpop.xlane.xlu0 %152
    %v154 = vcvt.f32.s32 %v153
    %v155 = vcvt.f32.s32 %v149
    %v156 = vshll.u32 %v155, 16
    %v157 = vadd.s32 %v156, %v154
    %v158 = vsel %vm132, %v142, 2147483647
    %v159 = vand.u32 %v158, 65535
    %v160 = vshra.s32 %v158, 16
    %v161 = vcvt.s32.f32 %v159
    %v162 = vcvt.s32.f32 %v160
    %163 = vmin.xlane.f32.xlu0 %v162
    %v164 = vpop.xlane.xlu0 %163
    %vm165 = vcmp.eq.f32.partialorder %v162, %v164
    %v166 = vsel %vm165, %v161, inf
    %167 = vmin.xlane.f32.xlu0 %v166
    %v168 = vpop.xlane.xlu0 %167
    %v169 = vcvt.f32.s32 %v168
    %v170 = vcvt.f32.s32 %v164
    %v171 = vshll.u32 %v170, 16
    %v172 = vadd.s32 %v171, %v169
    %vm173 = vcmp.eq.s32.totalorder %v117, %v157
    %vm174 = vcmp.eq.s32.totalorder %v117, %v172
    %v175 = vsel %vm173, 1, 0
    %v176 = vsel %vm174, 1, 0
    %v177 = vcvt.s32.f32 %v175
    %v178 = vcvt.s32.f32 %v176
    %v179 = vadd.f32 %v177, 0.0
    %v180 = vadd.f32 %v178, 0.0
    %v181 = vsel %vm173, inf, %v130
    %v182 = vsel %vm174, inf, %v131
    %v183 = vsel %vm132, %v181, inf
    %184 = vmin.xlane.f32.xlu0 %v183
    %v185 = vpop.xlane.xlu0 %184
    %v186 = vsel %vm132, %v182, inf
    %187 = vmin.xlane.f32.xlu0 %v186
    %v188 = vpop.xlane.xlu0 %187
    %vm189 = vcmp.eq.f32.partialorder %v181, %v185
    %vm190 = vcmp.eq.f32.partialorder %v182, %v188
    %v191 = vsel %vm189, %v117, 16
    %v192 = vsel %vm190, %v117, 16
    %v193 = vsel %vm132, %v191, 2147483647
    %v194 = vand.u32 %v193, 65535
    %v195 = vshra.s32 %v193, 16
    %v196 = vcvt.s32.f32 %v194
    %v197 = vcvt.s32.f32 %v195
    %198 = vmin.xlane.f32.xlu0 %v197
    %v199 = vpop.xlane.xlu0 %198
    %vm200 = vcmp.eq.f32.partialorder %v197, %v199
    %v201 = vsel %vm200, %v196, inf
    %202 = vmin.xlane.f32.xlu0 %v201
    %v203 = vpop.xlane.xlu0 %202
    %v204 = vcvt.f32.s32 %v203
    %v205 = vcvt.f32.s32 %v199
    %v206 = vshll.u32 %v205, 16
    %v207 = vadd.s32 %v206, %v204
    %v208 = vsel %vm132, %v192, 2147483647
    %v209 = vand.u32 %v208, 65535
    %v210 = vshra.s32 %v208, 16
    %v211 = vcvt.s32.f32 %v209
    %v212 = vcvt.s32.f32 %v210
    %213 = vmin.xlane.f32.xlu0 %v212
    %v214 = vpop.xlane.xlu0 %213
    %vm215 = vcmp.eq.f32.partialorder %v212, %v214
    %v216 = vsel %vm215, %v211, inf
    %217 = vmin.xlane.f32.xlu0 %v216
    %v218 = vpop.xlane.xlu0 %217
    %v219 = vcvt.f32.s32 %v218
    %v220 = vcvt.f32.s32 %v214
    %v221 = vshll.u32 %v220, 16
    %v222 = vadd.s32 %v221, %v219
    %vm223 = vcmp.eq.s32.totalorder %v117, %v207
    %vm224 = vcmp.eq.s32.totalorder %v117, %v222
    %v225 = vsel %vm223, 1, 0
    %v226 = vsel %vm224, 1, 0
    %v227 = vcvt.s32.f32 %v225
    %v228 = vcvt.s32.f32 %v226
    %v229 = vadd.f32 %v179, %v227
    %v230 = vadd.f32 %v180, %v228
    %v231 = vsel %vm223, inf, %v181
    %v232 = vsel %vm224, inf, %v182
    %v233 = vsel %vm132, %v231, inf
    %234 = vmin.xlane.f32.xlu0 %v233
    %v235 = vpop.xlane.xlu0 %234
    %v236 = vsel %vm132, %v232, inf
    %237 = vmin.xlane.f32.xlu0 %v236
    %v238 = vpop.xlane.xlu0 %237
    %vm239 = vcmp.eq.f32.partialorder %v231, %v235
    %vm240 = vcmp.eq.f32.partialorder %v232, %v238
    %v241 = vsel %vm239, %v117, 16
    %v242 = vsel %vm240, %v117, 16
    %v243 = vsel %vm132, %v241, 2147483647
    %v244 = vand.u32 %v243, 65535
    %v245 = vshra.s32 %v243, 16
    %v246 = vcvt.s32.f32 %v244
    %v247 = vcvt.s32.f32 %v245
    %248 = vmin.xlane.f32.xlu0 %v247
    %v249 = vpop.xlane.xlu0 %248
    %vm250 = vcmp.eq.f32.partialorder %v247, %v249
    %v251 = vsel %vm250, %v246, inf
    %252 = vmin.xlane.f32.xlu0 %v251
    %v253 = vpop.xlane.xlu0 %252
    %v254 = vcvt.f32.s32 %v253
    %v255 = vcvt.f32.s32 %v249
    %v256 = vshll.u32 %v255, 16
    %v257 = vadd.s32 %v256, %v254
    %v258 = vsel %vm132, %v242, 2147483647
    %v259 = vand.u32 %v258, 65535
    %v260 = vshra.s32 %v258, 16
    %v261 = vcvt.s32.f32 %v259
    %v262 = vcvt.s32.f32 %v260
    %263 = vmin.xlane.f32.xlu0 %v262
    %v264 = vpop.xlane.xlu0 %263
    %vm265 = vcmp.eq.f32.partialorder %v262, %v264
    %v266 = vsel %vm265, %v261, inf
    %267 = vmin.xlane.f32.xlu0 %v266
    %v268 = vpop.xlane.xlu0 %267
    %v269 = vcvt.f32.s32 %v268
    %v270 = vcvt.f32.s32 %v264
    %v271 = vshll.u32 %v270, 16
    %v272 = vadd.s32 %v271, %v269
    %vm273 = vcmp.eq.s32.totalorder %v117, %v257
    %vm274 = vcmp.eq.s32.totalorder %v117, %v272
    %v275 = vsel %vm273, 1, 0
    %v276 = vsel %vm274, 1, 0
    %v277 = vcvt.s32.f32 %v275
    %v278 = vcvt.s32.f32 %v276
    %v279 = vadd.f32 %v229, %v277
    %v280 = vadd.f32 %v230, %v278
    %v281 = vsel %vm273, inf, %v231
    %v282 = vsel %vm274, inf, %v232
    %v283 = vsel %vm132, %v281, inf
    %284 = vmin.xlane.f32.xlu0 %v283
    %v285 = vpop.xlane.xlu0 %284
    %v286 = vsel %vm132, %v282, inf
    %287 = vmin.xlane.f32.xlu0 %v286
    %v288 = vpop.xlane.xlu0 %287
    %vm289 = vcmp.eq.f32.partialorder %v281, %v285
    %vm290 = vcmp.eq.f32.partialorder %v282, %v288
    %v291 = vsel %vm289, %v117, 16
    %v292 = vsel %vm290, %v117, 16
    %v293 = vsel %vm132, %v291, 2147483647
    %v294 = vand.u32 %v293, 65535
    %v295 = vshra.s32 %v293, 16
    %v296 = vcvt.s32.f32 %v294
    %v297 = vcvt.s32.f32 %v295
    %298 = vmin.xlane.f32.xlu0 %v297
    %v299 = vpop.xlane.xlu0 %298
    %vm300 = vcmp.eq.f32.partialorder %v297, %v299
    %v301 = vsel %vm300, %v296, inf
    %302 = vmin.xlane.f32.xlu0 %v301
    %v303 = vpop.xlane.xlu0 %302
    %v304 = vcvt.f32.s32 %v303
    %v305 = vcvt.f32.s32 %v299
    %v306 = vshll.u32 %v305, 16
    %v307 = vadd.s32 %v306, %v304
    %v308 = vsel %vm132, %v292, 2147483647
    %v309 = vand.u32 %v308, 65535
    %v310 = vshra.s32 %v308, 16
    %v311 = vcvt.s32.f32 %v309
    %v312 = vcvt.s32.f32 %v310
    %313 = vmin.xlane.f32.xlu0 %v312
    %v314 = vpop.xlane.xlu0 %313
    %vm315 = vcmp.eq.f32.partialorder %v312, %v314
    %v316 = vsel %vm315, %v311, inf
    %317 = vmin.xlane.f32.xlu0 %v316
    %v318 = vpop.xlane.xlu0 %317
    %v319 = vcvt.f32.s32 %v318
    %v320 = vcvt.f32.s32 %v314
    %v321 = vshll.u32 %v320, 16
    %v322 = vadd.s32 %v321, %v319
    %vm323 = vcmp.eq.s32.totalorder %v117, %v307
    %vm324 = vcmp.eq.s32.totalorder %v117, %v322
    %v325 = vsel %vm323, 1, 0
    %v326 = vsel %vm324, 1, 0
    %v327 = vcvt.s32.f32 %v325
    %v328 = vcvt.s32.f32 %v326
    %v329 = vadd.f32 %v279, %v327
    %v330 = vadd.f32 %v280, %v328
    %v331 = vsel %vm323, inf, %v281
    %v332 = vsel %vm324, inf, %v282
    %v333 = vsel %vm132, %v331, inf
    %334 = vmin.xlane.f32.xlu0 %v333
    %v335 = vpop.xlane.xlu0 %334
    %v336 = vsel %vm132, %v332, inf
    %337 = vmin.xlane.f32.xlu0 %v336
    %v338 = vpop.xlane.xlu0 %337
    %vm339 = vcmp.eq.f32.partialorder %v331, %v335
    %vm340 = vcmp.eq.f32.partialorder %v332, %v338
    %v341 = vsel %vm339, %v117, 16
    %v342 = vsel %vm340, %v117, 16
    %v343 = vsel %vm132, %v341, 2147483647
    %v344 = vand.u32 %v343, 65535
    %v345 = vshra.s32 %v343, 16
    %v346 = vcvt.s32.f32 %v344
    %v347 = vcvt.s32.f32 %v345
    %348 = vmin.xlane.f32.xlu0 %v347
    %v349 = vpop.xlane.xlu0 %348
    %vm350 = vcmp.eq.f32.partialorder %v347, %v349
    %v351 = vsel %vm350, %v346, inf
    %352 = vmin.xlane.f32.xlu0 %v351
    %v353 = vpop.xlane.xlu0 %352
    %v354 = vcvt.f32.s32 %v353
    %v355 = vcvt.f32.s32 %v349
    %v356 = vshll.u32 %v355, 16
    %v357 = vadd.s32 %v356, %v354
    %v358 = vsel %vm132, %v342, 2147483647
    %v359 = vand.u32 %v358, 65535
    %v360 = vshra.s32 %v358, 16
    %v361 = vcvt.s32.f32 %v359
    %v362 = vcvt.s32.f32 %v360
    %363 = vmin.xlane.f32.xlu0 %v362
    %v364 = vpop.xlane.xlu0 %363
    %vm365 = vcmp.eq.f32.partialorder %v362, %v364
    %v366 = vsel %vm365, %v361, inf
    %367 = vmin.xlane.f32.xlu0 %v366
    %v368 = vpop.xlane.xlu0 %367
    %v369 = vcvt.f32.s32 %v368
    %v370 = vcvt.f32.s32 %v364
    %v371 = vshll.u32 %v370, 16
    %v372 = vadd.s32 %v371, %v369
    %vm373 = vcmp.eq.s32.totalorder %v117, %v357
    %vm374 = vcmp.eq.s32.totalorder %v117, %v372
    %v375 = vsel %vm373, 1, 0
    %v376 = vsel %vm374, 1, 0
    %v377 = vcvt.s32.f32 %v375
    %v378 = vcvt.s32.f32 %v376
    %v379 = vadd.f32 %v329, %v377
    %v380 = vadd.f32 %v330, %v378
    %v382 = vsel %vm132, %v379, 0
    %v385 = vsel %vm132, %v380, 0
    %387 = vmatprep.subr.mxu0 0.0
    %388 = vmatpush1.msra.mxu0 0.0
    %389 = vmatprep.subr.mxu0 0.0
    %390 = vmatpush1.msra.mxu0 0.0
    %391 = vmatprep.subr.mxu0 0.0
    %392 = vmatpush1.msra.mxu0 0.0
    %393 = vmatprep.subr.mxu0 0.0
    %394 = vmatpush1.msra.mxu0 0.0
    %395 = vmatprep.subr.mxu0 0.0
    %396 = vmatpush1.msra.mxu0 0.0
    %397 = vmatprep.subr.mxu0 0.0
    %398 = vmatpush1.msra.mxu0 0.0
    %399 = vmatprep.subr.mxu0 0.0
    %400 = vmatpush1.msra.mxu0 0.0
    %401 = vmatprep.subr.mxu0 0.0
    %402 = vmatpush1.msra.mxu0 0.0
    %403 = vmatprep.subr.mxu0 0.0
    %404 = vmatpush1.msra.mxu0 0.0
    %405 = vmatprep.subr.mxu0 0.0
    %406 = vmatpush1.msra.mxu0 0.0
    %407 = vmatprep.subr.mxu0 0.0
    %408 = vmatpush1.msra.mxu0 0.0
    %409 = vmatprep.subr.mxu0 0.0
    %410 = vmatpush1.msra.mxu0 0.0
    %411 = vmatprep.subr.mxu0 0.0
    %412 = vmatpush1.msra.mxu0 0.0
    %413 = vmatprep.subr.mxu0 0.0
    %414 = vmatpush1.msra.mxu0 0.0
    %415 = vmatprep.subr.mxu0 0.0
    %416 = vmatpush1.msra.mxu0 %v22
    %417 = vmatprep.subr.mxu0 0.0
    %418 = vmatpush1.msra.mxu0 %v21
    %419 = vmatprep.subr.mxu0 0.0
    %420 = vmatpush2.msra.mxu0 0.0
    %421 = vmatprep.subr.mxu0 0.0
    %422 = vmatpush2.msra.mxu0 0.0
    %423 = vmatprep.subr.mxu0 0.0
    %424 = vmatpush2.msra.mxu0 0.0
    %425 = vmatprep.subr.mxu0 0.0
    %426 = vmatpush2.msra.mxu0 0.0
    %427 = vmatprep.subr.mxu0 0.0
    %428 = vmatpush2.msra.mxu0 0.0
    %429 = vmatprep.subr.mxu0 0.0
    %430 = vmatpush2.msra.mxu0 0.0
    %431 = vmatprep.subr.mxu0 0.0
    %432 = vmatpush2.msra.mxu0 0.0
    %433 = vmatprep.subr.mxu0 0.0
    %434 = vmatpush2.msra.mxu0 0.0
    %435 = vmatprep.subr.mxu0 0.0
    %436 = vmatpush2.msra.mxu0 0.0
    %437 = vmatprep.subr.mxu0 0.0
    %438 = vmatpush2.msra.mxu0 0.0
    %439 = vmatprep.subr.mxu0 0.0
    %440 = vmatpush2.msra.mxu0 0.0
    %441 = vmatprep.subr.mxu0 0.0
    %442 = vmatpush2.msra.mxu0 0.0
    %443 = vmatprep.subr.mxu0 0.0
    %444 = vmatpush2.msra.mxu0 0.0
    %445 = vmatprep.subr.mxu0 0.0
    %446 = vmatpush2.msra.mxu0 0.0
    %447 = vmatprep.subr.mxu0 0.0
    %448 = vmatpush2.msra.mxu0 0.0
    %449 = vmatprep.subr.mxu0 0.0
    %450 = vmatpush2.msra.mxu0 0.0
    %451 = vmatprep.mubr.f32.mxu0 0.0
    %452 = vmatmul.mubr.f32.gmra.mxu0 %v382
    %v453 = vpop.f32.mrf.mxu0
    %v454 = vadd.f32 0.0, %v453
    %v455 = vpop.f32.mrf.mxu0
    %456 = vmatprep.mubr.f32.mxu0 0.0
    %457 = vmatmul.mubr.f32.gmra.mxu0 %v385
    %v458 = vpop.f32.mrf.mxu0
    %v459 = vadd.f32 0.0, %v458
    %v460 = vpop.f32.mrf.mxu0
    %461 = vdwg.mxu0
    %462 = vst [vmem:[#allocation2] sm:$0xff] %v454
    %463 = vst [vmem:[#allocation2 + $0x8] sm:$0xff] %v459
    // Predicated region
    $region18: #{tpu_custom_call.1} parent=1 // pred_check
      _
    $region19: #{tpu_custom_call.1} parent=1 // pred_check_branch
      %465 = sbr.rel (0) target = $region21
    $region20: #{tpu_custom_call.1} parent=1 // pred_region
      %s467 = ssub.s32 256, 256
      %468 = vsyncadd [#allocation3], %s467
      %s469 = sshll.u32 [#allocation2], 4
      %s470 = int_to_ptr.vmem [resolvable:$true] %s469
      %475 = dma.vmem_to_hbm [thread:$0]  %s470, 256, %s4, [#allocation3], 128, 128, 8
    $region21: #{tpu_custom_call.1} parent=1 // pred_fallthru
      _
    // Predicated region
    $region22: #{tpu_custom_call.1} parent=1 // pred_check
      _
    $region23: #{tpu_custom_call.1} parent=1 // pred_check_branch
      %477 = sbr.rel (0) target = $region25
    $region24: #{tpu_custom_call.1} parent=1 // pred_region
      %478 = dma.done [#allocation3], 256
    $region25: #{tpu_custom_call.1} parent=1 // pred_fallthru
      _
    %479 = vsyncpa [#allocation3], 1

</llo_original>
